<compile_context>
chip_gen: v6e
topology: v6e:2x2x1
jax: 0.10.0
libtpu: 0.0.40
codegen_flags: <defaults>
</compile_context>

<pallas_src>
import functools

import jax
import jax.numpy as jnp
from jax import lax
from jax.experimental import pallas as pl
from jax.experimental.pallas import tpu as pltpu

EPS = 1e-5
_GP = 8  # sublane group size used when packing the weight slab


# ----------------------------- Pallas kernel --------------------------------

def _block_kernel(x_ref, w_ref, o_ref, *, H, W, NI, Cin, Cout, offs):
    """Fully fused Block forward for NI images per grid step.

    x_ref : (NI, Cin, H*W)  input, spatial flattened onto the lane axis
    w_ref : (R, 1)          all folded conv weights / BN shifts in one f32 slab
                            (8-row groups, channel values on sublanes at lane 0)
    o_ref : (NI, Cout, H*W)
    """
    HW = H * W

    # Per-tap validity masks for the zero-padded 3x3 depthwise conv, built once
    # per grid step at exact (C, HW) shapes (no boolean broadcasting needed).
    # H, W are compile-time constants; use shift/and when W is a power of two.
    def make_masks(C):
        col = lax.broadcasted_iota(jnp.int32, (C, HW), 1)
        if (W & (W - 1)) == 0:
            hh = col >> (W.bit_length() - 1)
            ww = col & (W - 1)
        else:
            hh = col // W
            ww = col - hh * W
        top, bot = hh >= 1, hh <= H - 2
        lef, rig = ww >= 1, ww <= W - 2
        return {(-1, -1): top & lef, (-1, 0): top, (-1, 1): top & rig,
                (0, -1): lef,        (0, 0): None, (0, 1): rig,
                (1, -1): bot & lef,  (1, 0): bot,  (1, 1): bot & rig}

    masks = {c: make_masks(c) for c in sorted({Cin, Cout})}

    def wcol(off, n):
        # (n, 1) weight column; lane-broadcasts against (n, HW) activations.
        return w_ref[off:off + n, :]

    def dw_conv_bn(a_in, woff, boff, C):
        # ReLU -> depthwise 3x3 (zero padding via masked rolls) -> folded-BN shift.
        # relu(pad(x)) == pad(relu(x)) since relu(0) == 0.
        a = jnp.maximum(a_in, 0.0)
        m = masks[C]
        acc = jnp.zeros((C, HW), jnp.float32)
        t = 0
        for kh in (-1, 0, 1):
            for kw in (-1, 0, 1):
                s = kh * W + kw
                v = a if s == 0 else pltpu.roll(a, shift=(-s) % HW, axis=1)
                if m[(kh, kw)] is not None:            # center tap: no mask
                    v = jnp.where(m[(kh, kw)], v, 0.0)  # exact zero padding
                acc = acc + wcol(woff + _GP * t, C) * v  # (C,1)*(C,HW)
                t += 1
        return acc + wcol(boff, C)

    def pw_conv(inp, woff, Ci, Co):
        # 1x1 conv on the VPU: out[co,:] = sum_ci w[ci,co] * inp[ci,:]
        acc = jnp.zeros((Co, HW), jnp.float32)
        for ci in range(Ci):
            acc = acc + wcol(woff + _GP * ci, Co) * inp[ci:ci + 1, :]
        return acc

    for i in range(NI):
        x = x_ref[i].astype(jnp.float32)                         # (Cin, HW)
        # rep: ReLU -> SepConv(Cin->Cout) -> BN
        h = (pw_conv(dw_conv_bn(x, offs["dw1_w"], offs["dw1_b"], Cin),
                     offs["pw1_w"], Cin, Cout)
             + wcol(offs["pw1_b"], Cout))
        # rep: ReLU -> SepConv(Cout->Cout) -> BN, skip 1x1+BN, residual add
        g = dw_conv_bn(h, offs["dw2_w"], offs["dw2_b"], Cout)
        out = (pw_conv(g, offs["pw2_w"], Cout, Cout)
               + pw_conv(x, offs["skip_w"], Cin, Cout)
               + wcol(offs["out_b"], Cout))
        o_ref[i] = out.astype(o_ref.dtype)


# ------------------------------ wrapper --------------------------------------

def _pack_weight_slab(p, cin, cout):
    """Fold BN scales into conv weights and pack every weight/shift into ONE
    (R, 1) f32 slab (single DMA).  Each logical channel column is padded to an
    8-row sublane group so all in-kernel slices are sublane-aligned."""
    pieces = [
        ("dw1_w", (p["dw1_w"] * p["dw1_scale"]).reshape(9, cin)),    # 9 taps x Cin
        ("dw1_b", p["dw1_shift"].reshape(1, cin)),
        ("pw1_w", p["pw1_w"] * p["bn1_scale"]),                      # Cin x Cout
        ("pw1_b", p["bn1_shift"].reshape(1, cout)),
        ("dw2_w", (p["dw2_w"] * p["dw2_scale"]).reshape(9, cout)),   # 9 taps x Cout
        ("dw2_b", p["dw2_shift"].reshape(1, cout)),
        ("pw2_w", p["pw2_w"] * p["bn2_scale"]),                      # Cout x Cout
        ("skip_w", p["skip_w"] * p["skip_scale"]),                   # Cin x Cout
        ("out_b", (p["bn2_shift"] + p["skip_shift"]).reshape(1, cout)),
    ]
    offs, cols, cur = {}, [], 0
    for name, arr in pieces:
        g, c = arr.shape
        offs[name] = cur
        padded = jnp.zeros((g, _GP), jnp.float32).at[:, :c].set(arr.astype(jnp.float32))
        cols.append(padded.reshape(g * _GP, 1))
        cur += g * _GP
    return jnp.concatenate(cols, axis=0), offs, cur


def block_forward(inp_nchw, p):
    """Pallas forward pass of `Block`. Input/output are NCHW like PyTorch."""
    N, Cin, H, W = inp_nchw.shape
    Cout = p["pw1_w"].shape[1]
    HW = H * W
    assert Cin <= _GP and Cout <= _GP, "this toy config packs one sublane group per column"

    x = inp_nchw.reshape(N, Cin, HW)          # free reshape: spatial -> lane axis
    slab, offs, R = _pack_weight_slab(p, Cin, Cout)

    # Few fat grid steps: 2 when the batch splits evenly (keeps both v7x
    # TensorCores busy; ~one extra 0.35us step on single-TC v5e/v6e), else 1.
    # Any extra images per step are handled by the in-kernel loop.
    NB = 2 if (N >= 2 and N % 2 == 0) else 1
    NI = N // NB

    kern = functools.partial(_block_kernel, H=H, W=W, NI=NI, Cin=Cin, Cout=Cout,
                             offs=offs)
    out = pl.pallas_call(
        kern,
        out_shape=jax.ShapeDtypeStruct((N, Cout, HW), inp_nchw.dtype),
        grid=(NB,),
        in_specs=[
            pl.BlockSpec((NI, Cin, HW), lambda b: (b, 0, 0)),
            pl.BlockSpec((R, 1), lambda b: (0, 0)),   # weight slab: one constant DMA
        ],
        out_specs=pl.BlockSpec((NI, Cout, HW), lambda b: (b, 0, 0)),
        compiler_params=pltpu.CompilerParams(dimension_semantics=("parallel",)),
    )(x, slab)
    return out.reshape(N, Cout, H, W)


# ------------------------------ reference ------------------------------------

def ref_forward(inp_nchw, p):
    x = jnp.transpose(inp_nchw, (0, 2, 3, 1))  # NHWC
    N, H, W, Cin = x.shape
    Cout = p["pw1_w"].shape[1]
    hp = lax.Precision.HIGHEST

    def dwconv(a, w):  # a: NHWC, w: (3,3,C); zero pad 1 (fixed_padding, k=3, d=1)
        ap = jnp.pad(a, ((0, 0), (1, 1), (1, 1), (0, 0)))
        out = jnp.zeros_like(a)
        for kh in range(3):
            for kw in range(3):
                out = out + ap[:, kh:kh + H, kw:kw + W, :] * w[kh, kw, :]
        return out

    h = jnp.maximum(x, 0.0)
    h = dwconv(h, p["dw1_w"]) * p["dw1_scale"] + p["dw1_shift"]
    h = jnp.dot(h.reshape(-1, Cin), p["pw1_w"], precision=hp) * p["bn1_scale"] + p["bn1_shift"]
    h = h.reshape(N, H, W, Cout)

    g = jnp.maximum(h, 0.0)
    g = dwconv(g, p["dw2_w"]) * p["dw2_scale"] + p["dw2_shift"]
    g = jnp.dot(g.reshape(-1, Cout), p["pw2_w"], precision=hp) * p["bn2_scale"] + p["bn2_shift"]
    g = g.reshape(N, H, W, Cout)

    skip = jnp.dot(x.reshape(-1, Cin), p["skip_w"], precision=hp) * p["skip_scale"] + p["skip_shift"]
    skip = skip.reshape(N, H, W, Cout)

    out = g + skip
    return jnp.transpose(out, (0, 3, 1, 2))


# ------------------------------ params ---------------------------------------

def _folded_bn(key, c):
    k1, k2, k3, k4 = jax.random.split(key, 4)
    gamma = 1.0 + 0.1 * jax.random.normal(k1, (c,), jnp.float32)
    beta = 0.1 * jax.random.normal(k2, (c,), jnp.float32)
    mean = 0.1 * jax.random.normal(k3, (c,), jnp.float32)
    var = jax.random.uniform(k4, (c,), jnp.float32, minval=0.5, maxval=1.5)
    scale = gamma / jnp.sqrt(var + EPS)
    shift = beta - mean * scale
    return scale, shift


def make_params(key, cin, cout):
    ks = jax.random.split(key, 10)
    p = {}
    p["dw1_w"] = 0.2 * jax.random.normal(ks[0], (3, 3, cin), jnp.float32)
    p["dw1_scale"], p["dw1_shift"] = _folded_bn(ks[1], cin)          # SepConv1 internal BN
    p["pw1_w"] = 0.2 * jax.random.normal(ks[2], (cin, cout), jnp.float32)
    p["bn1_scale"], p["bn1_shift"] = _folded_bn(ks[3], cout)         # rep BN after SepConv1

    p["dw2_w"] = 0.2 * jax.random.normal(ks[4], (3, 3, cout), jnp.float32)
    p["dw2_scale"], p["dw2_shift"] = _folded_bn(ks[5], cout)         # SepConv2 internal BN
    p["pw2_w"] = 0.2 * jax.random.normal(ks[6], (cout, cout), jnp.float32)
    p["bn2_scale"], p["bn2_shift"] = _folded_bn(ks[7], cout)         # rep BN after SepConv2

    p["skip_w"] = 0.2 * jax.random.normal(ks[8], (cin, cout), jnp.float32)
    p["skip_scale"], p["skip_shift"] = _folded_bn(ks[9], cout)       # skipbn
    return p


# -------------------------------- main ----------------------------------------

if __name__ == "__main__":
    N, Cin, Cout, H, W = 2, 4, 8, 16, 16
    key = jax.random.PRNGKey(0)
    kx, kp = jax.random.split(key)
    x = jax.random.normal(kx, (N, Cin, H, W), jnp.float32)   # NCHW, as in PyTorch
    params = make_params(kp, Cin, Cout)

    out = jax.jit(block_forward)(x, params)
    out = jax.block_until_ready(out)

    ref = ref_forward(x, params)
    assert out.shape == (N, Cout, H, W), out.shape
    err = float(jnp.max(jnp.abs(out - ref)))
    assert jnp.allclose(out, ref, rtol=1e-4, atol=1e-4), err

    print("KERNEL_OK")
</pallas_src>

<mosaic_0001>
module attributes {stable_mosaic.version = 11 : i64} {
  func.func @_block_kernel(%arg0: i32, %arg1: memref<1x4x256xf32, #tpu.memory_space<vmem>>, %arg2: memref<304x1xf32, #tpu.memory_space<vmem>>, %arg3: memref<1x8x256xf32, #tpu.memory_space<vmem>>) attributes {dimension_semantics = [#tpu.dimension_semantics<parallel>], iteration_bounds = array<i64: 2>, scalar_prefetch = 0 : i64, scratch_operands = 0 : i64, tpu.core_type = #tpu.core_type<tc>, window_params = [{transform_indices = @transform_0, window_bounds = array<i64: 1, 4, 256>}, {pipeline_mode = #tpu.pipeline_mode<synchronous>, transform_indices = @transform_1, window_bounds = array<i64: 304, 1>}, {transform_indices = @transform_2, window_bounds = array<i64: 1, 8, 256>}]} {
    %0 = tpu.iota {dimensions = array<i32: 1>} : vector<4x256xi32>
    %c4_i32 = arith.constant 4 : i32
    %1 = vector.broadcast %c4_i32 : i32 to vector<4x256xi32>
    %2 = arith.shrsi %0, %1 : vector<4x256xi32>
    %c15_i32 = arith.constant 15 : i32
    %3 = vector.broadcast %c15_i32 : i32 to vector<4x256xi32>
    %4 = arith.andi %0, %3 : vector<4x256xi32>
    %c1_i32 = arith.constant 1 : i32
    %5 = vector.broadcast %c1_i32 : i32 to vector<4x256xi32>
    %6 = arith.cmpi sge, %2, %5 : vector<4x256xi32>
    %c14_i32 = arith.constant 14 : i32
    %7 = vector.broadcast %c14_i32 : i32 to vector<4x256xi32>
    %8 = arith.cmpi sle, %2, %7 : vector<4x256xi32>
    %c1_i32_0 = arith.constant 1 : i32
    %9 = vector.broadcast %c1_i32_0 : i32 to vector<4x256xi32>
    %10 = arith.cmpi sge, %4, %9 : vector<4x256xi32>
    %c14_i32_1 = arith.constant 14 : i32
    %11 = vector.broadcast %c14_i32_1 : i32 to vector<4x256xi32>
    %12 = arith.cmpi sle, %4, %11 : vector<4x256xi32>
    %13 = arith.andi %6, %10 : vector<4x256xi1>
    %14 = arith.andi %6, %12 : vector<4x256xi1>
    %15 = arith.andi %8, %10 : vector<4x256xi1>
    %16 = arith.andi %8, %12 : vector<4x256xi1>
    %17 = tpu.iota {dimensions = array<i32: 1>} : vector<8x256xi32>
    %c4_i32_2 = arith.constant 4 : i32
    %18 = vector.broadcast %c4_i32_2 : i32 to vector<8x256xi32>
    %19 = arith.shrsi %17, %18 : vector<8x256xi32>
    %c15_i32_3 = arith.constant 15 : i32
    %20 = vector.broadcast %c15_i32_3 : i32 to vector<8x256xi32>
    %21 = arith.andi %17, %20 : vector<8x256xi32>
    %c1_i32_4 = arith.constant 1 : i32
    %22 = vector.broadcast %c1_i32_4 : i32 to vector<8x256xi32>
    %23 = arith.cmpi sge, %19, %22 : vector<8x256xi32>
    %c14_i32_5 = arith.constant 14 : i32
    %24 = vector.broadcast %c14_i32_5 : i32 to vector<8x256xi32>
    %25 = arith.cmpi sle, %19, %24 : vector<8x256xi32>
    %c1_i32_6 = arith.constant 1 : i32
    %26 = vector.broadcast %c1_i32_6 : i32 to vector<8x256xi32>
    %27 = arith.cmpi sge, %21, %26 : vector<8x256xi32>
    %c14_i32_7 = arith.constant 14 : i32
    %28 = vector.broadcast %c14_i32_7 : i32 to vector<8x256xi32>
    %29 = arith.cmpi sle, %21, %28 : vector<8x256xi32>
    %30 = arith.andi %23, %27 : vector<8x256xi1>
    %31 = arith.andi %23, %29 : vector<8x256xi1>
    %32 = arith.andi %25, %27 : vector<8x256xi1>
    %33 = arith.andi %25, %29 : vector<8x256xi1>
    %c0 = arith.constant 0 : index
    %c0_8 = arith.constant 0 : index
    %c0_9 = arith.constant 0 : index
    %34 = vector.load %arg1[%c0, %c0_8, %c0_9] : memref<1x4x256xf32, #tpu.memory_space<vmem>>, vector<1x4x256xf32>
    %35 = vector.shape_cast %34 : vector<1x4x256xf32> to vector<4x256xf32>
    %cst = arith.constant 0.000000e+00 : f32
    %36 = vector.broadcast %cst : f32 to vector<4x256xf32>
    %37 = arith.maximumf %35, %36 : vector<4x256xf32>
    %cst_10 = arith.constant 0.000000e+00 : f32
    %38 = vector.broadcast %cst_10 : f32 to vector<4x256xf32>
    %c17_i32 = arith.constant 17 : i32
    %39 = tpu.dynamic_rotate %37 by %c17_i32 dim 1 : vector<4x256xf32>, i32 -> vector<4x256xf32>
    %cst_11 = arith.constant 0.000000e+00 : f32
    %40 = vector.broadcast %cst_11 : f32 to vector<4x256xf32>
    %41 = arith.select %13, %39, %40 : vector<4x256xi1>, vector<4x256xf32>
    %c0_12 = arith.constant 0 : index
    %c0_13 = arith.constant 0 : index
    %42 = vector.load %arg2[%c0_12, %c0_13] : memref<304x1xf32, #tpu.memory_space<vmem>>, vector<4x1xf32>
    %43 = vector.broadcast %42 : vector<4x1xf32> to vector<4x256xf32>
    %44 = arith.mulf %43, %41 : vector<4x256xf32>
    %45 = arith.addf %38, %44 : vector<4x256xf32>
    %c16_i32 = arith.constant 16 : i32
    %46 = tpu.dynamic_rotate %37 by %c16_i32 dim 1 : vector<4x256xf32>, i32 -> vector<4x256xf32>
    %cst_14 = arith.constant 0.000000e+00 : f32
    %47 = vector.broadcast %cst_14 : f32 to vector<4x256xf32>
    %48 = arith.select %6, %46, %47 : vector<4x256xi1>, vector<4x256xf32>
    %c8 = arith.constant 8 : index
    %c0_15 = arith.constant 0 : index
    %49 = vector.load %arg2[%c8, %c0_15] : memref<304x1xf32, #tpu.memory_space<vmem>>, vector<4x1xf32>
    %50 = vector.broadcast %49 : vector<4x1xf32> to vector<4x256xf32>
    %51 = arith.mulf %50, %48 : vector<4x256xf32>
    %52 = arith.addf %45, %51 : vector<4x256xf32>
    %c15_i32_16 = arith.constant 15 : i32
    %53 = tpu.dynamic_rotate %37 by %c15_i32_16 dim 1 : vector<4x256xf32>, i32 -> vector<4x256xf32>
    %cst_17 = arith.constant 0.000000e+00 : f32
    %54 = vector.broadcast %cst_17 : f32 to vector<4x256xf32>
    %55 = arith.select %14, %53, %54 : vector<4x256xi1>, vector<4x256xf32>
    %c16 = arith.constant 16 : index
    %c0_18 = arith.constant 0 : index
    %56 = vector.load %arg2[%c16, %c0_18] : memref<304x1xf32, #tpu.memory_space<vmem>>, vector<4x1xf32>
    %57 = vector.broadcast %56 : vector<4x1xf32> to vector<4x256xf32>
    %58 = arith.mulf %57, %55 : vector<4x256xf32>
    %59 = arith.addf %52, %58 : vector<4x256xf32>
    %c1_i32_19 = arith.constant 1 : i32
    %60 = tpu.dynamic_rotate %37 by %c1_i32_19 dim 1 : vector<4x256xf32>, i32 -> vector<4x256xf32>
    %cst_20 = arith.constant 0.000000e+00 : f32
    %61 = vector.broadcast %cst_20 : f32 to vector<4x256xf32>
    %62 = arith.select %10, %60, %61 : vector<4x256xi1>, vector<4x256xf32>
    %c24 = arith.constant 24 : index
    %c0_21 = arith.constant 0 : index
    %63 = vector.load %arg2[%c24, %c0_21] : memref<304x1xf32, #tpu.memory_space<vmem>>, vector<4x1xf32>
    %64 = vector.broadcast %63 : vector<4x1xf32> to vector<4x256xf32>
    %65 = arith.mulf %64, %62 : vector<4x256xf32>
    %66 = arith.addf %59, %65 : vector<4x256xf32>
    %c32 = arith.constant 32 : index
    %c0_22 = arith.constant 0 : index
    %67 = vector.load %arg2[%c32, %c0_22] : memref<304x1xf32, #tpu.memory_space<vmem>>, vector<4x1xf32>
    %68 = vector.broadcast %67 : vector<4x1xf32> to vector<4x256xf32>
    %69 = arith.mulf %68, %37 : vector<4x256xf32>
    %70 = arith.addf %66, %69 : vector<4x256xf32>
    %c255_i32 = arith.constant 255 : i32
    %71 = tpu.dynamic_rotate %37 by %c255_i32 dim 1 : vector<4x256xf32>, i32 -> vector<4x256xf32>
    %cst_23 = arith.constant 0.000000e+00 : f32
    %72 = vector.broadcast %cst_23 : f32 to vector<4x256xf32>
    %73 = arith.select %12, %71, %72 : vector<4x256xi1>, vector<4x256xf32>
    %c40 = arith.constant 40 : index
    %c0_24 = arith.constant 0 : index
    %74 = vector.load %arg2[%c40, %c0_24] : memref<304x1xf32, #tpu.memory_space<vmem>>, vector<4x1xf32>
    %75 = vector.broadcast %74 : vector<4x1xf32> to vector<4x256xf32>
    %76 = arith.mulf %75, %73 : vector<4x256xf32>
    %77 = arith.addf %70, %76 : vector<4x256xf32>
    %c241_i32 = arith.constant 241 : i32
    %78 = tpu.dynamic_rotate %37 by %c241_i32 dim 1 : vector<4x256xf32>, i32 -> vector<4x256xf32>
    %cst_25 = arith.constant 0.000000e+00 : f32
    %79 = vector.broadcast %cst_25 : f32 to vector<4x256xf32>
    %80 = arith.select %15, %78, %79 : vector<4x256xi1>, vector<4x256xf32>
    %c48 = arith.constant 48 : index
    %c0_26 = arith.constant 0 : index
    %81 = vector.load %arg2[%c48, %c0_26] : memref<304x1xf32, #tpu.memory_space<vmem>>, vector<4x1xf32>
    %82 = vector.broadcast %81 : vector<4x1xf32> to vector<4x256xf32>
    %83 = arith.mulf %82, %80 : vector<4x256xf32>
    %84 = arith.addf %77, %83 : vector<4x256xf32>
    %c240_i32 = arith.constant 240 : i32
    %85 = tpu.dynamic_rotate %37 by %c240_i32 dim 1 : vector<4x256xf32>, i32 -> vector<4x256xf32>
    %cst_27 = arith.constant 0.000000e+00 : f32
    %86 = vector.broadcast %cst_27 : f32 to vector<4x256xf32>
    %87 = arith.select %8, %85, %86 : vector<4x256xi1>, vector<4x256xf32>
    %c56 = arith.constant 56 : index
    %c0_28 = arith.constant 0 : index
    %88 = vector.load %arg2[%c56, %c0_28] : memref<304x1xf32, #tpu.memory_space<vmem>>, vector<4x1xf32>
    %89 = vector.broadcast %88 : vector<4x1xf32> to vector<4x256xf32>
    %90 = arith.mulf %89, %87 : vector<4x256xf32>
    %91 = arith.addf %84, %90 : vector<4x256xf32>
    %c239_i32 = arith.constant 239 : i32
    %92 = tpu.dynamic_rotate %37 by %c239_i32 dim 1 : vector<4x256xf32>, i32 -> vector<4x256xf32>
    %cst_29 = arith.constant 0.000000e+00 : f32
    %93 = vector.broadcast %cst_29 : f32 to vector<4x256xf32>
    %94 = arith.select %16, %92, %93 : vector<4x256xi1>, vector<4x256xf32>
    %c64 = arith.constant 64 : index
    %c0_30 = arith.constant 0 : index
    %95 = vector.load %arg2[%c64, %c0_30] : memref<304x1xf32, #tpu.memory_space<vmem>>, vector<4x1xf32>
    %96 = vector.broadcast %95 : vector<4x1xf32> to vector<4x256xf32>
    %97 = arith.mulf %96, %94 : vector<4x256xf32>
    %98 = arith.addf %91, %97 : vector<4x256xf32>
    %c72 = arith.constant 72 : index
    %c0_31 = arith.constant 0 : index
    %99 = vector.load %arg2[%c72, %c0_31] : memref<304x1xf32, #tpu.memory_space<vmem>>, vector<4x1xf32>
    %100 = vector.broadcast %99 : vector<4x1xf32> to vector<4x256xf32>
    %101 = arith.addf %98, %100 : vector<4x256xf32>
    %cst_32 = arith.constant 0.000000e+00 : f32
    %102 = vector.broadcast %cst_32 : f32 to vector<8x256xf32>
    %c80 = arith.constant 80 : index
    %c0_33 = arith.constant 0 : index
    %103 = vector.load %arg2[%c80, %c0_33] : memref<304x1xf32, #tpu.memory_space<vmem>>, vector<8x1xf32>
    %104 = vector.extract_strided_slice %101 {offsets = [0, 0], sizes = [1, 256], strides = [1, 1]} : vector<4x256xf32> to vector<1x256xf32>
    %105 = vector.broadcast %103 : vector<8x1xf32> to vector<8x256xf32>
    %106 = vector.broadcast %104 : vector<1x256xf32> to vector<8x256xf32>
    %107 = arith.mulf %105, %106 : vector<8x256xf32>
    %108 = arith.addf %102, %107 : vector<8x256xf32>
    %c88 = arith.constant 88 : index
    %c0_34 = arith.constant 0 : index
    %109 = vector.load %arg2[%c88, %c0_34] : memref<304x1xf32, #tpu.memory_space<vmem>>, vector<8x1xf32>
    %110 = vector.extract_strided_slice %101 {offsets = [1, 0], sizes = [1, 256], strides = [1, 1]} : vector<4x256xf32> to vector<1x256xf32>
    %111 = vector.broadcast %109 : vector<8x1xf32> to vector<8x256xf32>
    %112 = vector.broadcast %110 : vector<1x256xf32> to vector<8x256xf32>
    %113 = arith.mulf %111, %112 : vector<8x256xf32>
    %114 = arith.addf %108, %113 : vector<8x256xf32>
    %c96 = arith.constant 96 : index
    %c0_35 = arith.constant 0 : index
    %115 = vector.load %arg2[%c96, %c0_35] : memref<304x1xf32, #tpu.memory_space<vmem>>, vector<8x1xf32>
    %116 = vector.extract_strided_slice %101 {offsets = [2, 0], sizes = [1, 256], strides = [1, 1]} : vector<4x256xf32> to vector<1x256xf32>
    %117 = vector.broadcast %115 : vector<8x1xf32> to vector<8x256xf32>
    %118 = vector.broadcast %116 : vector<1x256xf32> to vector<8x256xf32>
    %119 = arith.mulf %117, %118 : vector<8x256xf32>
    %120 = arith.addf %114, %119 : vector<8x256xf32>
    %c104 = arith.constant 104 : index
    %c0_36 = arith.constant 0 : index
    %121 = vector.load %arg2[%c104, %c0_36] : memref<304x1xf32, #tpu.memory_space<vmem>>, vector<8x1xf32>
    %122 = vector.extract_strided_slice %101 {offsets = [3, 0], sizes = [1, 256], strides = [1, 1]} : vector<4x256xf32> to vector<1x256xf32>
    %123 = vector.broadcast %121 : vector<8x1xf32> to vector<8x256xf32>
    %124 = vector.broadcast %122 : vector<1x256xf32> to vector<8x256xf32>
    %125 = arith.mulf %123, %124 : vector<8x256xf32>
    %126 = arith.addf %120, %125 : vector<8x256xf32>
    %c112 = arith.constant 112 : index
    %c0_37 = arith.constant 0 : index
    %127 = vector.load %arg2[%c112, %c0_37] : memref<304x1xf32, #tpu.memory_space<vmem>>, vector<8x1xf32>
    %128 = vector.broadcast %127 : vector<8x1xf32> to vector<8x256xf32>
    %129 = arith.addf %126, %128 : vector<8x256xf32>
    %cst_38 = arith.constant 0.000000e+00 : f32
    %130 = vector.broadcast %cst_38 : f32 to vector<8x256xf32>
    %131 = arith.maximumf %129, %130 : vector<8x256xf32>
    %cst_39 = arith.constant 0.000000e+00 : f32
    %132 = vector.broadcast %cst_39 : f32 to vector<8x256xf32>
    %c17_i32_40 = arith.constant 17 : i32
    %133 = tpu.dynamic_rotate %131 by %c17_i32_40 dim 1 : vector<8x256xf32>, i32 -> vector<8x256xf32>
    %cst_41 = arith.constant 0.000000e+00 : f32
    %134 = vector.broadcast %cst_41 : f32 to vector<8x256xf32>
    %135 = arith.select %30, %133, %134 : vector<8x256xi1>, vector<8x256xf32>
    %c120 = arith.constant 120 : index
    %c0_42 = arith.constant 0 : index
    %136 = vector.load %arg2[%c120, %c0_42] : memref<304x1xf32, #tpu.memory_space<vmem>>, vector<8x1xf32>
    %137 = vector.broadcast %136 : vector<8x1xf32> to vector<8x256xf32>
    %138 = arith.mulf %137, %135 : vector<8x256xf32>
    %139 = arith.addf %132, %138 : vector<8x256xf32>
    %c16_i32_43 = arith.constant 16 : i32
    %140 = tpu.dynamic_rotate %131 by %c16_i32_43 dim 1 : vector<8x256xf32>, i32 -> vector<8x256xf32>
    %cst_44 = arith.constant 0.000000e+00 : f32
    %141 = vector.broadcast %cst_44 : f32 to vector<8x256xf32>
    %142 = arith.select %23, %140, %141 : vector<8x256xi1>, vector<8x256xf32>
    %c128 = arith.constant 128 : index
    %c0_45 = arith.constant 0 : index
    %143 = vector.load %arg2[%c128, %c0_45] : memref<304x1xf32, #tpu.memory_space<vmem>>, vector<8x1xf32>
    %144 = vector.broadcast %143 : vector<8x1xf32> to vector<8x256xf32>
    %145 = arith.mulf %144, %142 : vector<8x256xf32>
    %146 = arith.addf %139, %145 : vector<8x256xf32>
    %c15_i32_46 = arith.constant 15 : i32
    %147 = tpu.dynamic_rotate %131 by %c15_i32_46 dim 1 : vector<8x256xf32>, i32 -> vector<8x256xf32>
    %cst_47 = arith.constant 0.000000e+00 : f32
    %148 = vector.broadcast %cst_47 : f32 to vector<8x256xf32>
    %149 = arith.select %31, %147, %148 : vector<8x256xi1>, vector<8x256xf32>
    %c136 = arith.constant 136 : index
    %c0_48 = arith.constant 0 : index
    %150 = vector.load %arg2[%c136, %c0_48] : memref<304x1xf32, #tpu.memory_space<vmem>>, vector<8x1xf32>
    %151 = vector.broadcast %150 : vector<8x1xf32> to vector<8x256xf32>
    %152 = arith.mulf %151, %149 : vector<8x256xf32>
    %153 = arith.addf %146, %152 : vector<8x256xf32>
    %c1_i32_49 = arith.constant 1 : i32
    %154 = tpu.dynamic_rotate %131 by %c1_i32_49 dim 1 : vector<8x256xf32>, i32 -> vector<8x256xf32>
    %cst_50 = arith.constant 0.000000e+00 : f32
    %155 = vector.broadcast %cst_50 : f32 to vector<8x256xf32>
    %156 = arith.select %27, %154, %155 : vector<8x256xi1>, vector<8x256xf32>
    %c144 = arith.constant 144 : index
    %c0_51 = arith.constant 0 : index
    %157 = vector.load %arg2[%c144, %c0_51] : memref<304x1xf32, #tpu.memory_space<vmem>>, vector<8x1xf32>
    %158 = vector.broadcast %157 : vector<8x1xf32> to vector<8x256xf32>
    %159 = arith.mulf %158, %156 : vector<8x256xf32>
    %160 = arith.addf %153, %159 : vector<8x256xf32>
    %c152 = arith.constant 152 : index
    %c0_52 = arith.constant 0 : index
    %161 = vector.load %arg2[%c152, %c0_52] : memref<304x1xf32, #tpu.memory_space<vmem>>, vector<8x1xf32>
    %162 = vector.broadcast %161 : vector<8x1xf32> to vector<8x256xf32>
    %163 = arith.mulf %162, %131 : vector<8x256xf32>
    %164 = arith.addf %160, %163 : vector<8x256xf32>
    %c255_i32_53 = arith.constant 255 : i32
    %165 = tpu.dynamic_rotate %131 by %c255_i32_53 dim 1 : vector<8x256xf32>, i32 -> vector<8x256xf32>
    %cst_54 = arith.constant 0.000000e+00 : f32
    %166 = vector.broadcast %cst_54 : f32 to vector<8x256xf32>
    %167 = arith.select %29, %165, %166 : vector<8x256xi1>, vector<8x256xf32>
    %c160 = arith.constant 160 : index
    %c0_55 = arith.constant 0 : index
    %168 = vector.load %arg2[%c160, %c0_55] : memref<304x1xf32, #tpu.memory_space<vmem>>, vector<8x1xf32>
    %169 = vector.broadcast %168 : vector<8x1xf32> to vector<8x256xf32>
    %170 = arith.mulf %169, %167 : vector<8x256xf32>
    %171 = arith.addf %164, %170 : vector<8x256xf32>
    %c241_i32_56 = arith.constant 241 : i32
    %172 = tpu.dynamic_rotate %131 by %c241_i32_56 dim 1 : vector<8x256xf32>, i32 -> vector<8x256xf32>
    %cst_57 = arith.constant 0.000000e+00 : f32
    %173 = vector.broadcast %cst_57 : f32 to vector<8x256xf32>
    %174 = arith.select %32, %172, %173 : vector<8x256xi1>, vector<8x256xf32>
    %c168 = arith.constant 168 : index
    %c0_58 = arith.constant 0 : index
    %175 = vector.load %arg2[%c168, %c0_58] : memref<304x1xf32, #tpu.memory_space<vmem>>, vector<8x1xf32>
    %176 = vector.broadcast %175 : vector<8x1xf32> to vector<8x256xf32>
    %177 = arith.mulf %176, %174 : vector<8x256xf32>
    %178 = arith.addf %171, %177 : vector<8x256xf32>
    %c240_i32_59 = arith.constant 240 : i32
    %179 = tpu.dynamic_rotate %131 by %c240_i32_59 dim 1 : vector<8x256xf32>, i32 -> vector<8x256xf32>
    %cst_60 = arith.constant 0.000000e+00 : f32
    %180 = vector.broadcast %cst_60 : f32 to vector<8x256xf32>
    %181 = arith.select %25, %179, %180 : vector<8x256xi1>, vector<8x256xf32>
    %c176 = arith.constant 176 : index
    %c0_61 = arith.constant 0 : index
    %182 = vector.load %arg2[%c176, %c0_61] : memref<304x1xf32, #tpu.memory_space<vmem>>, vector<8x1xf32>
    %183 = vector.broadcast %182 : vector<8x1xf32> to vector<8x256xf32>
    %184 = arith.mulf %183, %181 : vector<8x256xf32>
    %185 = arith.addf %178, %184 : vector<8x256xf32>
    %c239_i32_62 = arith.constant 239 : i32
    %186 = tpu.dynamic_rotate %131 by %c239_i32_62 dim 1 : vector<8x256xf32>, i32 -> vector<8x256xf32>
    %cst_63 = arith.constant 0.000000e+00 : f32
    %187 = vector.broadcast %cst_63 : f32 to vector<8x256xf32>
    %188 = arith.select %33, %186, %187 : vector<8x256xi1>, vector<8x256xf32>
    %c184 = arith.constant 184 : index
    %c0_64 = arith.constant 0 : index
    %189 = vector.load %arg2[%c184, %c0_64] : memref<304x1xf32, #tpu.memory_space<vmem>>, vector<8x1xf32>
    %190 = vector.broadcast %189 : vector<8x1xf32> to vector<8x256xf32>
    %191 = arith.mulf %190, %188 : vector<8x256xf32>
    %192 = arith.addf %185, %191 : vector<8x256xf32>
    %c192 = arith.constant 192 : index
    %c0_65 = arith.constant 0 : index
    %193 = vector.load %arg2[%c192, %c0_65] : memref<304x1xf32, #tpu.memory_space<vmem>>, vector<8x1xf32>
    %194 = vector.broadcast %193 : vector<8x1xf32> to vector<8x256xf32>
    %195 = arith.addf %192, %194 : vector<8x256xf32>
    %cst_66 = arith.constant 0.000000e+00 : f32
    %196 = vector.broadcast %cst_66 : f32 to vector<8x256xf32>
    %c200 = arith.constant 200 : index
    %c0_67 = arith.constant 0 : index
    %197 = vector.load %arg2[%c200, %c0_67] : memref<304x1xf32, #tpu.memory_space<vmem>>, vector<8x1xf32>
    %198 = vector.extract_strided_slice %195 {offsets = [0, 0], sizes = [1, 256], strides = [1, 1]} : vector<8x256xf32> to vector<1x256xf32>
    %199 = vector.broadcast %197 : vector<8x1xf32> to vector<8x256xf32>
    %200 = vector.broadcast %198 : vector<1x256xf32> to vector<8x256xf32>
    %201 = arith.mulf %199, %200 : vector<8x256xf32>
    %202 = arith.addf %196, %201 : vector<8x256xf32>
    %c208 = arith.constant 208 : index
    %c0_68 = arith.constant 0 : index
    %203 = vector.load %arg2[%c208, %c0_68] : memref<304x1xf32, #tpu.memory_space<vmem>>, vector<8x1xf32>
    %204 = vector.extract_strided_slice %195 {offsets = [1, 0], sizes = [1, 256], strides = [1, 1]} : vector<8x256xf32> to vector<1x256xf32>
    %205 = vector.broadcast %203 : vector<8x1xf32> to vector<8x256xf32>
    %206 = vector.broadcast %204 : vector<1x256xf32> to vector<8x256xf32>
    %207 = arith.mulf %205, %206 : vector<8x256xf32>
    %208 = arith.addf %202, %207 : vector<8x256xf32>
    %c216 = arith.constant 216 : index
    %c0_69 = arith.constant 0 : index
    %209 = vector.load %arg2[%c216, %c0_69] : memref<304x1xf32, #tpu.memory_space<vmem>>, vector<8x1xf32>
    %210 = vector.extract_strided_slice %195 {offsets = [2, 0], sizes = [1, 256], strides = [1, 1]} : vector<8x256xf32> to vector<1x256xf32>
    %211 = vector.broadcast %209 : vector<8x1xf32> to vector<8x256xf32>
    %212 = vector.broadcast %210 : vector<1x256xf32> to vector<8x256xf32>
    %213 = arith.mulf %211, %212 : vector<8x256xf32>
    %214 = arith.addf %208, %213 : vector<8x256xf32>
    %c224 = arith.constant 224 : index
    %c0_70 = arith.constant 0 : index
    %215 = vector.load %arg2[%c224, %c0_70] : memref<304x1xf32, #tpu.memory_space<vmem>>, vector<8x1xf32>
    %216 = vector.extract_strided_slice %195 {offsets = [3, 0], sizes = [1, 256], strides = [1, 1]} : vector<8x256xf32> to vector<1x256xf32>
    %217 = vector.broadcast %215 : vector<8x1xf32> to vector<8x256xf32>
    %218 = vector.broadcast %216 : vector<1x256xf32> to vector<8x256xf32>
    %219 = arith.mulf %217, %218 : vector<8x256xf32>
    %220 = arith.addf %214, %219 : vector<8x256xf32>
    %c232 = arith.constant 232 : index
    %c0_71 = arith.constant 0 : index
    %221 = vector.load %arg2[%c232, %c0_71] : memref<304x1xf32, #tpu.memory_space<vmem>>, vector<8x1xf32>
    %222 = vector.extract_strided_slice %195 {offsets = [4, 0], sizes = [1, 256], strides = [1, 1]} : vector<8x256xf32> to vector<1x256xf32>
    %223 = vector.broadcast %221 : vector<8x1xf32> to vector<8x256xf32>
    %224 = vector.broadcast %222 : vector<1x256xf32> to vector<8x256xf32>
    %225 = arith.mulf %223, %224 : vector<8x256xf32>
    %226 = arith.addf %220, %225 : vector<8x256xf32>
    %c240 = arith.constant 240 : index
    %c0_72 = arith.constant 0 : index
    %227 = vector.load %arg2[%c240, %c0_72] : memref<304x1xf32, #tpu.memory_space<vmem>>, vector<8x1xf32>
    %228 = vector.extract_strided_slice %195 {offsets = [5, 0], sizes = [1, 256], strides = [1, 1]} : vector<8x256xf32> to vector<1x256xf32>
    %229 = vector.broadcast %227 : vector<8x1xf32> to vector<8x256xf32>
    %230 = vector.broadcast %228 : vector<1x256xf32> to vector<8x256xf32>
    %231 = arith.mulf %229, %230 : vector<8x256xf32>
    %232 = arith.addf %226, %231 : vector<8x256xf32>
    %c248 = arith.constant 248 : index
    %c0_73 = arith.constant 0 : index
    %233 = vector.load %arg2[%c248, %c0_73] : memref<304x1xf32, #tpu.memory_space<vmem>>, vector<8x1xf32>
    %234 = vector.extract_strided_slice %195 {offsets = [6, 0], sizes = [1, 256], strides = [1, 1]} : vector<8x256xf32> to vector<1x256xf32>
    %235 = vector.broadcast %233 : vector<8x1xf32> to vector<8x256xf32>
    %236 = vector.broadcast %234 : vector<1x256xf32> to vector<8x256xf32>
    %237 = arith.mulf %235, %236 : vector<8x256xf32>
    %238 = arith.addf %232, %237 : vector<8x256xf32>
    %c256 = arith.constant 256 : index
    %c0_74 = arith.constant 0 : index
    %239 = vector.load %arg2[%c256, %c0_74] : memref<304x1xf32, #tpu.memory_space<vmem>>, vector<8x1xf32>
    %240 = vector.extract_strided_slice %195 {offsets = [7, 0], sizes = [1, 256], strides = [1, 1]} : vector<8x256xf32> to vector<1x256xf32>
    %241 = vector.broadcast %239 : vector<8x1xf32> to vector<8x256xf32>
    %242 = vector.broadcast %240 : vector<1x256xf32> to vector<8x256xf32>
    %243 = arith.mulf %241, %242 : vector<8x256xf32>
    %244 = arith.addf %238, %243 : vector<8x256xf32>
    %cst_75 = arith.constant 0.000000e+00 : f32
    %245 = vector.broadcast %cst_75 : f32 to vector<8x256xf32>
    %c264 = arith.constant 264 : index
    %c0_76 = arith.constant 0 : index
    %246 = vector.load %arg2[%c264, %c0_76] : memref<304x1xf32, #tpu.memory_space<vmem>>, vector<8x1xf32>
    %247 = vector.extract_strided_slice %35 {offsets = [0, 0], sizes = [1, 256], strides = [1, 1]} : vector<4x256xf32> to vector<1x256xf32>
    %248 = vector.broadcast %246 : vector<8x1xf32> to vector<8x256xf32>
    %249 = vector.broadcast %247 : vector<1x256xf32> to vector<8x256xf32>
    %250 = arith.mulf %248, %249 : vector<8x256xf32>
    %251 = arith.addf %245, %250 : vector<8x256xf32>
    %c272 = arith.constant 272 : index
    %c0_77 = arith.constant 0 : index
    %252 = vector.load %arg2[%c272, %c0_77] : memref<304x1xf32, #tpu.memory_space<vmem>>, vector<8x1xf32>
    %253 = vector.extract_strided_slice %35 {offsets = [1, 0], sizes = [1, 256], strides = [1, 1]} : vector<4x256xf32> to vector<1x256xf32>
    %254 = vector.broadcast %252 : vector<8x1xf32> to vector<8x256xf32>
    %255 = vector.broadcast %253 : vector<1x256xf32> to vector<8x256xf32>
    %256 = arith.mulf %254, %255 : vector<8x256xf32>
    %257 = arith.addf %251, %256 : vector<8x256xf32>
    %c280 = arith.constant 280 : index
    %c0_78 = arith.constant 0 : index
    %258 = vector.load %arg2[%c280, %c0_78] : memref<304x1xf32, #tpu.memory_space<vmem>>, vector<8x1xf32>
    %259 = vector.extract_strided_slice %35 {offsets = [2, 0], sizes = [1, 256], strides = [1, 1]} : vector<4x256xf32> to vector<1x256xf32>
    %260 = vector.broadcast %258 : vector<8x1xf32> to vector<8x256xf32>
    %261 = vector.broadcast %259 : vector<1x256xf32> to vector<8x256xf32>
    %262 = arith.mulf %260, %261 : vector<8x256xf32>
    %263 = arith.addf %257, %262 : vector<8x256xf32>
    %c288 = arith.constant 288 : index
    %c0_79 = arith.constant 0 : index
    %264 = vector.load %arg2[%c288, %c0_79] : memref<304x1xf32, #tpu.memory_space<vmem>>, vector<8x1xf32>
    %265 = vector.extract_strided_slice %35 {offsets = [3, 0], sizes = [1, 256], strides = [1, 1]} : vector<4x256xf32> to vector<1x256xf32>
    %266 = vector.broadcast %264 : vector<8x1xf32> to vector<8x256xf32>
    %267 = vector.broadcast %265 : vector<1x256xf32> to vector<8x256xf32>
    %268 = arith.mulf %266, %267 : vector<8x256xf32>
    %269 = arith.addf %263, %268 : vector<8x256xf32>
    %270 = arith.addf %244, %269 : vector<8x256xf32>
    %c296 = arith.constant 296 : index
    %c0_80 = arith.constant 0 : index
    %271 = vector.load %arg2[%c296, %c0_80] : memref<304x1xf32, #tpu.memory_space<vmem>>, vector<8x1xf32>
    %272 = vector.broadcast %271 : vector<8x1xf32> to vector<8x256xf32>
    %273 = arith.addf %270, %272 : vector<8x256xf32>
    %c0_81 = arith.constant 0 : index
    %c0_82 = arith.constant 0 : index
    %c0_83 = arith.constant 0 : index
    %274 = vector.load %arg3[%c0_81, %c0_82, %c0_83] : memref<1x8x256xf32, #tpu.memory_space<vmem>>, vector<1x8x256xf32>
    %275 = vector.shape_cast %274 : vector<1x8x256xf32> to vector<8x256xf32>
    %276 = vector.shape_cast %273 : vector<8x256xf32> to vector<1x8x256xf32>
    tpu.vector_store %arg3[%c0_81, %c0_82, %c0_83], %276 {strides = array<i32>} : memref<1x8x256xf32, #tpu.memory_space<vmem>>, vector<1x8x256xf32>,
    return
  }
  func.func @transform_0(%arg0: i32) -> (i32, i32, i32) {
    %c0_i32 = arith.constant 0 : i32
    %c0_i32_0 = arith.constant 0 : i32
    %c0_i32_1 = arith.constant 0 : i32
    return %arg0, %c0_i32, %c0_i32_0 : i32, i32, i32
  }
  func.func @transform_1(%arg0: i32) -> (i32, i32) {
    %c0_i32 = arith.constant 0 : i32
    %c0_i32_0 = arith.constant 0 : i32
    %c0_i32_1 = arith.constant 0 : i32
    return %c0_i32, %c0_i32_0 : i32, i32
  }
  func.func @transform_2(%arg0: i32) -> (i32, i32, i32) {
    %c0_i32 = arith.constant 0 : i32
    %c0_i32_0 = arith.constant 0 : i32
    %c0_i32_1 = arith.constant 0 : i32
    return %arg0, %c0_i32, %c0_i32_0 : i32, i32, i32
  }
}

</mosaic_0001>

<llo_original>
// kernel: block_forward.1
$region0: #{block_forward.1}
  #allocation0 [shape = 'u32[]', space=smem, size = 0x4, offset = 0x4, fixed_abs, tag = 'smem constant byte address 0x4 - core index']
  #allocation1 [shape = 'u32[144,128]{1,0:T(1,128)}', space=vmem, size = 0x12000, scoped, tag = 'internal scratch']
  %s0 = inlined_call_operand.vmem [shape: f32[2,4,256], index: 0, kind: input, shape index: {}]
  %s1 = inlined_call_operand.vmem [shape: f32[304,1], index: 1, kind: input, shape index: {}]
  %s2 = inlined_call_operand.vmem [shape: f32[2,8,256], index: 2, kind: output, shape index: {}]
  %s3 = sld [smem:[#allocation0]]
  $region41: #{block_forward.1} parent=0
    _
  %s5 = ssub.s32 1, %s3
  %s6 = scalar_select 0, %s5, %s3
  loop: start=0, step=1, limit=4
  $region2: #{block_forward.1} parent=0 // loop_pre_header
    _
  $region3: #{block_forward.1} parent=0 // loop_header
    %s8 = sphi 0, %s12
    %p9 = scmp.ge.s32.totalorder %s8, 4
    %s18 = sphi 0, %s20
    %s21 = sphi 0, %s18
    %s22 = sphi 0, %s21
    %s38 = sphi 0, %s22
    %s42 = sphi 0, %s42
    %s44 = sphi 0, %s42
    %s45 = sphi 0, %s44
    %s59 = sphi 0, %s45
    %s65 = sphi 0, %s67
    %s68 = sphi 0, %s65
    %s69 = sphi 0, %s68
    %s85 = sphi 0, %s69
  $region4: #{block_forward.1} parent=0 // loop_header_branch
    %11 = sbr.rel (%p9) target = $region8
  $region5: #{block_forward.1} parent=0 // loop_body
    %s13 = ssub.s32 %s8, 1
    %s14 = ssub.s32 %s8, 2
    %s15 = sadd.s32 %s8, 1
    %s16 = ssub.s32 %s8, %s15
    %p17 = scmp.eq.s32.totalorder %s16, 0
    %s19 = sadd.s32 %s18, 1
    %s20 = scalar_select %p17, %s18, %s19
    %p23 = pneg %p17
    %p24 = scmp.eq.s32.totalorder %s8, 1
    %p25 = por %p23, %p24
    %p26 = scmp.ne.s32.totalorder %s18, %s21
    %p27 = scmp.eq.s32.totalorder %s8, 0
    %p28 = por %p26, %p27
    %p29 = scmp.ne.s32.totalorder %s18, %s21
    %p30 = scmp.eq.s32.totalorder %s13, 1
    %p31 = por %p29, %p30
    %p32 = scmp.ne.s32.totalorder %s21, %s22
    %p33 = scmp.eq.s32.totalorder %s13, 0
    %p34 = por %p32, %p33
    %p35 = scmp.ne.s32.totalorder %s21, %s22
    %p36 = scmp.eq.s32.totalorder %s14, 1
    %p37 = por %p35, %p36
    %p39 = scmp.ne.s32.totalorder %s22, %s38
    %p40 = scmp.eq.s32.totalorder %s14, 0
    %p41 = por %p39, %p40
    %s43 = sadd.s32 %s42, 1
    %p46 = scmp.eq.s32.totalorder %s8, 1
    %p47 = scmp.ne.s32.totalorder %s42, %s44
    %p48 = scmp.eq.s32.totalorder %s8, 0
    %p49 = por %p47, %p48
    %p50 = scmp.ne.s32.totalorder %s42, %s44
    %p51 = scmp.eq.s32.totalorder %s13, 1
    %p52 = por %p50, %p51
    %p53 = scmp.ne.s32.totalorder %s44, %s45
    %p54 = scmp.eq.s32.totalorder %s13, 0
    %p55 = por %p53, %p54
    %p56 = scmp.ne.s32.totalorder %s44, %s45
    %p57 = scmp.eq.s32.totalorder %s14, 1
    %p58 = por %p56, %p57
    %p60 = scmp.ne.s32.totalorder %s45, %s59
    %p61 = scmp.eq.s32.totalorder %s14, 0
    %p62 = por %p60, %p61
    %s63 = ssub.s32 %s8, %s15
    %p64 = scmp.eq.s32.totalorder %s63, 0
    %s66 = sadd.s32 %s65, 1
    %s67 = scalar_select %p64, %s65, %s66
    %p70 = pneg %p64
    %p71 = scmp.eq.s32.totalorder %s8, 1
    %p72 = por %p70, %p71
    %p73 = scmp.ne.s32.totalorder %s65, %s68
    %p74 = scmp.eq.s32.totalorder %s8, 0
    %p75 = por %p73, %p74
    %p76 = scmp.ne.s32.totalorder %s65, %s68
    %p77 = scmp.eq.s32.totalorder %s13, 1
    %p78 = por %p76, %p77
    %p79 = scmp.ne.s32.totalorder %s68, %s69
    %p80 = scmp.eq.s32.totalorder %s13, 0
    %p81 = por %p79, %p80
    %p82 = scmp.ne.s32.totalorder %s68, %s69
    %p83 = scmp.eq.s32.totalorder %s14, 1
    %p84 = por %p82, %p83
    %p86 = scmp.ne.s32.totalorder %s69, %s85
    %p87 = scmp.eq.s32.totalorder %s14, 0
    %p88 = por %p86, %p87
    %p89 = scmp.le.s32.totalorder 1, %s8
    %p90 = scmp.lt.s32.totalorder %s8, 3
    %p91 = pnand %p89, %p90
    %p92 = pneg %p91
    // Predicated region
    $region9: #{block_forward.1} parent=5 // pred_check
      _
    $region10: #{block_forward.1} parent=5 // pred_check_branch
      %94 = sbr.rel (%p91) target = $region12
    $region11: #{block_forward.1} parent=5 // pred_region
      %s95 = ssub.s32 %s8, 1
      // Predicated region
      $region13: #{block_forward.1} parent=11 // pred_check
        %p96 = pneg %p55
      $region14: #{block_forward.1} parent=11 // pred_check_branch
        %98 = sbr.rel (%p96) target = $region16
      $region15: #{block_forward.1} parent=11 // pred_region
        _
      $region16: #{block_forward.1} parent=11 // pred_fallthru
        _
    $region12: #{block_forward.1} parent=5 // pred_fallthru
      _
    %p99 = scmp.lt.s32.totalorder %s8, 2
    // Predicated region
    $region17: #{block_forward.1} parent=5 // pred_check
      %p100 = pneg %p99
    $region18: #{block_forward.1} parent=5 // pred_check_branch
      %102 = sbr.rel (%p100) target = $region20
    $region19: #{block_forward.1} parent=5 // pred_region
      // Predicated region
      $region21: #{block_forward.1} parent=19 // pred_check
        %p103 = pneg %p28
      $region22: #{block_forward.1} parent=19 // pred_check_branch
        %105 = sbr.rel (%p103) target = $region24
      $region23: #{block_forward.1} parent=19 // pred_region
        %p106 = scmp.lt.s32.totalorder %s8, 1
        %s107 = scalar_select %p106, %s8, 1
        %s108 = smul.addr %s107, 2
        %s109 = smul.addr %s108, 4
        %s110 = scalar_lea.vmem %s0, %s109
      $region24: #{block_forward.1} parent=19 // pred_fallthru
        _
    $region20: #{block_forward.1} parent=5 // pred_fallthru
      _
    %p111 = scmp.le.s32.totalorder 1, %s8
    %p112 = scmp.lt.s32.totalorder %s8, 3
    %p113 = pnand %p111, %p112
    %p114 = pneg %p113
    // Predicated region
    $region25: #{block_forward.1} parent=5 // pred_check
      _
    $region26: #{block_forward.1} parent=5 // pred_check_branch
      %116 = sbr.rel (%p113) target = $region28
    $region27: #{block_forward.1} parent=5 // pred_region
      %s117 = ssub.s32 %s8, 1
      %p118 = scmp.lt.s32.totalorder %s13, 1
      %s119 = scalar_select %p118, %s13, 1
      %s120 = smul.addr %s119, 2
      %s121 = smul.addr %s120, 4
      %s122 = scalar_lea.vmem %s0, %s121
      %p123 = pneg %p34
      %p124 = pneg %p31
      %p125 = pneg %p55
      %p126 = pneg %p52
      %p127 = pneg %p81
      %p128 = pneg %p78
      %p129 = scmp.lt.s32.totalorder %s13, 1
      %s130 = scalar_select %p129, %s13, 1
      %s131 = smul.addr %s130, 2
      %s132 = smul.addr %s131, 8
      %s133 = scalar_lea.vmem %s2, %s132
      %p134 = scmp.lt.s32.totalorder %s13, 1
      %s135 = scalar_select %p134, %s13, 1
      %s136 = smul.addr %s135, 2
      %s137 = smul.addr %s136, 4
      %s138 = scalar_lea.vmem %s0, %s137
      %p139 = scmp.lt.s32.totalorder %s13, 1
      %s140 = scalar_select %p139, %s13, 1
      %s141 = smul.addr %s140, 2
      %s142 = smul.addr %s141, 8
      %s143 = scalar_lea.vmem %s2, %s142
      %v144 = vlaneseq
      %v145 = vand.u32 %v144, 127
      %v146 = vadd.s32 %v145, 128
      %v147 = vshra.s32 %v145, 4
      %v148 = vshra.s32 %v146, 4
      %v149 = vand.u32 %v145, 15
      %v150 = vand.u32 %v146, 15
      %vm151 = vcmp.ge.s32.totalorder %v147, 1
      %vm152 = vcmp.ge.s32.totalorder %v148, 1
      %vm153 = vcmp.le.s32.totalorder %v147, 14
      %vm154 = vcmp.le.s32.totalorder %v148, 14
      %vm155 = vcmp.ge.s32.totalorder %v149, 1
      %vm156 = vcmp.ge.s32.totalorder %v150, 1
      %vm157 = vcmp.le.s32.totalorder %v149, 14
      %vm158 = vcmp.le.s32.totalorder %v150, 14
      %vm159 = vmand %vm151, %vm155
      %vm160 = vmand %vm152, %vm156
      %vm161 = vmand %vm151, %vm157
      %vm162 = vmand %vm152, %vm158
      %vm163 = vmand %vm153, %vm155
      %vm164 = vmand %vm154, %vm156
      %vm165 = vmand %vm153, %vm157
      %vm166 = vmand %vm154, %vm158
      %v167 = vld [vmem:[%s138] sm:$0xff]
      %v168 = vmax.f32 %v167, 0.0
      %v170 = vcombine.high %v168, %v168
      %172 = vrot.lane.b32.xlu0 %v168, 17
      %v173 = vpop.permute.xlu0 %172
      %174 = vrot.lane.b32.xlu0 %v170, 17
      %v175 = vpop.permute.xlu0 %174
      %vm176 = vcmp.lt.s32.totalorder %v145, 17
      %v177 = vsel %vm176, %v173, %v175
      %v178 = vsel %vm176, %v175, %v173
      %v179 = vsel %vm159, %v178, 0.0
      %v180 = vsel %vm160, %v177, 0.0
      %v181 = vld [vmem:[%s1] sm:$0xf]
      %183 = vset.pattern.permute.xlu0 0
      %184 = vperm.xlu0 %183, %v181
      %v185 = vpop.permute.xlu0 %184
      %v187 = vmul.f32 %v185, %v179
      %v188 = vmul.f32 %v185, %v180
      %v189 = vadd.f32 %v187, 0.0
      %v190 = vadd.f32 %v188, 0.0
      %191 = vrot.lane.b32.xlu0 %v168, 16
      %v192 = vpop.permute.xlu0 %191
      %193 = vrot.lane.b32.xlu0 %v170, 16
      %v194 = vpop.permute.xlu0 %193
      %vm195 = vcmp.lt.s32.totalorder %v145, 16
      %v196 = vsel %vm195, %v192, %v194
      %v197 = vsel %vm195, %v194, %v192
      %v198 = vsel %vm151, %v197, 0.0
      %v199 = vsel %vm152, %v196, 0.0
      %v200 = vld [vmem:[%s1 + $0x8] sm:$0xf]
      %202 = vset.pattern.permute.xlu0 0
      %203 = vperm.xlu0 %202, %v200
      %v204 = vpop.permute.xlu0 %203
      %v206 = vmul.f32 %v204, %v198
      %v207 = vmul.f32 %v204, %v199
      %v208 = vadd.f32 %v189, %v206
      %v209 = vadd.f32 %v190, %v207
      %210 = vrot.lane.b32.xlu0 %v168, 15
      %v211 = vpop.permute.xlu0 %210
      %212 = vrot.lane.b32.xlu0 %v170, 15
      %v213 = vpop.permute.xlu0 %212
      %vm214 = vcmp.lt.s32.totalorder %v145, 15
      %v215 = vsel %vm214, %v211, %v213
      %v216 = vsel %vm214, %v213, %v211
      %v217 = vsel %vm161, %v216, 0.0
      %v218 = vsel %vm162, %v215, 0.0
      %v219 = vld [vmem:[%s1 + $0x10] sm:$0xf]
      %221 = vset.pattern.permute.xlu0 0
      %222 = vperm.xlu0 %221, %v219
      %v223 = vpop.permute.xlu0 %222
      %v225 = vmul.f32 %v223, %v217
      %v226 = vmul.f32 %v223, %v218
      %v227 = vadd.f32 %v208, %v225
      %v228 = vadd.f32 %v209, %v226
      %229 = vrot.lane.b32.xlu0 %v168, 1
      %v230 = vpop.permute.xlu0 %229
      %231 = vrot.lane.b32.xlu0 %v170, 1
      %v232 = vpop.permute.xlu0 %231
      %vm233 = vcmp.lt.s32.totalorder %v145, 1
      %v234 = vsel %vm233, %v230, %v232
      %v235 = vsel %vm233, %v232, %v230
      %v236 = vsel %vm155, %v235, 0.0
      %v237 = vsel %vm156, %v234, 0.0
      %v238 = vld [vmem:[%s1 + $0x18] sm:$0xf]
      %240 = vset.pattern.permute.xlu0 0
      %241 = vperm.xlu0 %240, %v238
      %v242 = vpop.permute.xlu0 %241
      %v244 = vmul.f32 %v242, %v236
      %v245 = vmul.f32 %v242, %v237
      %v246 = vadd.f32 %v227, %v244
      %v247 = vadd.f32 %v228, %v245
      %v248 = vld [vmem:[%s1 + $0x20] sm:$0xf]
      %250 = vset.pattern.permute.xlu0 0
      %251 = vperm.xlu0 %250, %v248
      %v252 = vpop.permute.xlu0 %251
      %v254 = vmul.f32 %v252, %v168
      %v255 = vmul.f32 %v252, %v170
      %v256 = vadd.f32 %v246, %v254
      %v257 = vadd.f32 %v247, %v255
      %258 = vrot.lane.b32.xlu0 %v168, 127
      %v259 = vpop.permute.xlu0 %258
      %260 = vrot.lane.b32.xlu0 %v170, 127
      %v261 = vpop.permute.xlu0 %260
      %vm262 = vcmp.lt.s32.totalorder %v145, 127
      %v263 = vsel %vm262, %v259, %v261
      %v264 = vsel %vm262, %v261, %v259
      %v265 = vsel %vm157, %v263, 0.0
      %v266 = vsel %vm158, %v264, 0.0
      %v267 = vld [vmem:[%s1 + $0x28] sm:$0xf]
      %269 = vset.pattern.permute.xlu0 0
      %270 = vperm.xlu0 %269, %v267
      %v271 = vpop.permute.xlu0 %270
      %v273 = vmul.f32 %v271, %v265
      %v274 = vmul.f32 %v271, %v266
      %v275 = vadd.f32 %v256, %v273
      %v276 = vadd.f32 %v257, %v274
      %277 = vrot.lane.b32.xlu0 %v168, 113
      %v278 = vpop.permute.xlu0 %277
      %279 = vrot.lane.b32.xlu0 %v170, 113
      %v280 = vpop.permute.xlu0 %279
      %vm281 = vcmp.lt.s32.totalorder %v145, 113
      %v282 = vsel %vm281, %v278, %v280
      %v283 = vsel %vm281, %v280, %v278
      %v284 = vsel %vm163, %v282, 0.0
      %v285 = vsel %vm164, %v283, 0.0
      %v286 = vld [vmem:[%s1 + $0x30] sm:$0xf]
      %288 = vset.pattern.permute.xlu0 0
      %289 = vperm.xlu0 %288, %v286
      %v290 = vpop.permute.xlu0 %289
      %v292 = vmul.f32 %v290, %v284
      %v293 = vmul.f32 %v290, %v285
      %v294 = vadd.f32 %v275, %v292
      %v295 = vadd.f32 %v276, %v293
      %296 = vrot.lane.b32.xlu0 %v168, 112
      %v297 = vpop.permute.xlu0 %296
      %298 = vrot.lane.b32.xlu0 %v170, 112
      %v299 = vpop.permute.xlu0 %298
      %vm300 = vcmp.lt.s32.totalorder %v145, 112
      %v301 = vsel %vm300, %v297, %v299
      %v302 = vsel %vm300, %v299, %v297
      %v303 = vsel %vm153, %v301, 0.0
      %v304 = vsel %vm154, %v302, 0.0
      %v305 = vld [vmem:[%s1 + $0x38] sm:$0xf]
      %307 = vset.pattern.permute.xlu0 0
      %308 = vperm.xlu0 %307, %v305
      %v309 = vpop.permute.xlu0 %308
      %v311 = vmul.f32 %v309, %v303
      %v312 = vmul.f32 %v309, %v304
      %v313 = vadd.f32 %v294, %v311
      %v314 = vadd.f32 %v295, %v312
      %315 = vrot.lane.b32.xlu0 %v168, 111
      %v316 = vpop.permute.xlu0 %315
      %317 = vrot.lane.b32.xlu0 %v170, 111
      %v318 = vpop.permute.xlu0 %317
      %vm319 = vcmp.lt.s32.totalorder %v145, 111
      %v320 = vsel %vm319, %v316, %v318
      %v321 = vsel %vm319, %v318, %v316
      %v322 = vsel %vm165, %v320, 0.0
      %v323 = vsel %vm166, %v321, 0.0
      %v324 = vld [vmem:[%s1 + $0x40] sm:$0xf]
      %326 = vset.pattern.permute.xlu0 0
      %327 = vperm.xlu0 %326, %v324
      %v328 = vpop.permute.xlu0 %327
      %v330 = vmul.f32 %v328, %v322
      %v331 = vmul.f32 %v328, %v323
      %v332 = vadd.f32 %v313, %v330
      %v333 = vadd.f32 %v314, %v331
      %v334 = vld [vmem:[%s1 + $0x48] sm:$0xf]
      %336 = vset.pattern.permute.xlu0 0
      %337 = vperm.xlu0 %336, %v334
      %v338 = vpop.permute.xlu0 %337
      %v340 = vadd.f32 %v332, %v338
      %v341 = vadd.f32 %v333, %v338
      %v342 = vld [vmem:[%s1 + $0x50] sm:$0xff]
      %344 = vset.pattern.permute.xlu0 0
      %345 = vperm.xlu0 %344, %v342
      %v346 = vpop.permute.xlu0 %345
      %v348 = vlaneseq
      %v349 = vshrl.u32 %v348, 7
      %v350 = vsub.s32 0, %v349
      %v351 = vrot.slane %v340, %v350
      %v352 = vlaneseq
      %v353 = vshrl.u32 %v352, 7
      %v354 = vsub.s32 0, %v353
      %v355 = vrot.slane %v341, %v354
      %v356 = vmul.f32 %v346, %v351
      %v357 = vmul.f32 %v346, %v355
      %v358 = vadd.f32 %v356, 0.0
      %v359 = vadd.f32 %v357, 0.0
      %v360 = vld [vmem:[%s1 + $0x58] sm:$0xff]
      %362 = vset.pattern.permute.xlu0 0
      %363 = vperm.xlu0 %362, %v360
      %v364 = vpop.permute.xlu0 %363
      %v366 = vlaneseq
      %v367 = vshrl.u32 %v366, 7
      %v368 = vsub.s32 1, %v367
      %v369 = vrot.slane %v340, %v368
      %v370 = vlaneseq
      %v371 = vshrl.u32 %v370, 7
      %v372 = vsub.s32 1, %v371
      %v373 = vrot.slane %v341, %v372
      %v374 = vmul.f32 %v364, %v369
      %v375 = vmul.f32 %v364, %v373
      %v376 = vadd.f32 %v358, %v374
      %v377 = vadd.f32 %v359, %v375
      %v378 = vld [vmem:[%s1 + $0x60] sm:$0xff]
      %380 = vset.pattern.permute.xlu0 0
      %381 = vperm.xlu0 %380, %v378
      %v382 = vpop.permute.xlu0 %381
      %v384 = vlaneseq
      %v385 = vshrl.u32 %v384, 7
      %v386 = vsub.s32 2, %v385
      %v387 = vrot.slane %v340, %v386
      %v388 = vlaneseq
      %v389 = vshrl.u32 %v388, 7
      %v390 = vsub.s32 2, %v389
      %v391 = vrot.slane %v341, %v390
      %v392 = vmul.f32 %v382, %v387
      %v393 = vmul.f32 %v382, %v391
      %v394 = vadd.f32 %v376, %v392
      %v395 = vadd.f32 %v377, %v393
      %v396 = vld [vmem:[%s1 + $0x68] sm:$0xff]
      %398 = vset.pattern.permute.xlu0 0
      %399 = vperm.xlu0 %398, %v396
      %v400 = vpop.permute.xlu0 %399
      %v402 = vlaneseq
      %v403 = vshrl.u32 %v402, 7
      %v404 = vsub.s32 3, %v403
      %v405 = vrot.slane %v340, %v404
      %v406 = vlaneseq
      %v407 = vshrl.u32 %v406, 7
      %v408 = vsub.s32 3, %v407
      %v409 = vrot.slane %v341, %v408
      %v410 = vmul.f32 %v400, %v405
      %v411 = vmul.f32 %v400, %v409
      %v412 = vadd.f32 %v394, %v410
      %v413 = vadd.f32 %v395, %v411
      %v414 = vld [vmem:[%s1 + $0x70] sm:$0xff]
      %416 = vset.pattern.permute.xlu0 0
      %417 = vperm.xlu0 %416, %v414
      %v418 = vpop.permute.xlu0 %417
      %v420 = vadd.f32 %v412, %v418
      %v421 = vadd.f32 %v413, %v418
      %v422 = vmax.f32 %v420, 0.0
      %v423 = vmax.f32 %v421, 0.0
      %424 = vrot.lane.b32.xlu0 %v422, 17
      %v425 = vpop.permute.xlu0 %424
      %426 = vrot.lane.b32.xlu0 %v423, 17
      %v427 = vpop.permute.xlu0 %426
      %v428 = vsel %vm176, %v425, %v427
      %v429 = vsel %vm176, %v427, %v425
      %v430 = vsel %vm159, %v429, 0.0
      %v431 = vsel %vm160, %v428, 0.0
      %v432 = vld [vmem:[%s1 + $0x78] sm:$0xff]
      %434 = vset.pattern.permute.xlu0 0
      %435 = vperm.xlu0 %434, %v432
      %v436 = vpop.permute.xlu0 %435
      %v438 = vmul.f32 %v436, %v430
      %v439 = vmul.f32 %v436, %v431
      %v440 = vadd.f32 %v438, 0.0
      %v441 = vadd.f32 %v439, 0.0
      %442 = vrot.lane.b32.xlu0 %v422, 16
      %v443 = vpop.permute.xlu0 %442
      %444 = vrot.lane.b32.xlu0 %v423, 16
      %v445 = vpop.permute.xlu0 %444
      %v446 = vsel %vm195, %v443, %v445
      %v447 = vsel %vm195, %v445, %v443
      %v448 = vsel %vm151, %v447, 0.0
      %v449 = vsel %vm152, %v446, 0.0
      %v450 = vld [vmem:[%s1 + $0x80] sm:$0xff]
      %452 = vset.pattern.permute.xlu0 0
      %453 = vperm.xlu0 %452, %v450
      %v454 = vpop.permute.xlu0 %453
      %v456 = vmul.f32 %v454, %v448
      %v457 = vmul.f32 %v454, %v449
      %v458 = vadd.f32 %v440, %v456
      %v459 = vadd.f32 %v441, %v457
      %460 = vrot.lane.b32.xlu0 %v422, 15
      %v461 = vpop.permute.xlu0 %460
      %462 = vrot.lane.b32.xlu0 %v423, 15
      %v463 = vpop.permute.xlu0 %462
      %v464 = vsel %vm214, %v461, %v463
      %v465 = vsel %vm214, %v463, %v461
      %v466 = vsel %vm161, %v465, 0.0
      %v467 = vsel %vm162, %v464, 0.0
      %v468 = vld [vmem:[%s1 + $0x88] sm:$0xff]
      %470 = vset.pattern.permute.xlu0 0
      %471 = vperm.xlu0 %470, %v468
      %v472 = vpop.permute.xlu0 %471
      %v474 = vmul.f32 %v472, %v466
      %v475 = vmul.f32 %v472, %v467
      %v476 = vadd.f32 %v458, %v474
      %v477 = vadd.f32 %v459, %v475
      %478 = vrot.lane.b32.xlu0 %v422, 1
      %v479 = vpop.permute.xlu0 %478
      %480 = vrot.lane.b32.xlu0 %v423, 1
      %v481 = vpop.permute.xlu0 %480
      %v482 = vsel %vm233, %v479, %v481
      %v483 = vsel %vm233, %v481, %v479
      %v484 = vsel %vm155, %v483, 0.0
      %v485 = vsel %vm156, %v482, 0.0
      %v486 = vld [vmem:[%s1 + $0x90] sm:$0xff]
      %488 = vset.pattern.permute.xlu0 0
      %489 = vperm.xlu0 %488, %v486
      %v490 = vpop.permute.xlu0 %489
      %v492 = vmul.f32 %v490, %v484
      %v493 = vmul.f32 %v490, %v485
      %v494 = vadd.f32 %v476, %v492
      %v495 = vadd.f32 %v477, %v493
      %v496 = vld [vmem:[%s1 + $0x98] sm:$0xff]
      %498 = vset.pattern.permute.xlu0 0
      %499 = vperm.xlu0 %498, %v496
      %v500 = vpop.permute.xlu0 %499
      %v502 = vmul.f32 %v500, %v422
      %v503 = vmul.f32 %v500, %v423
      %v504 = vadd.f32 %v494, %v502
      %v505 = vadd.f32 %v495, %v503
      %506 = vrot.lane.b32.xlu0 %v422, 127
      %v507 = vpop.permute.xlu0 %506
      %508 = vrot.lane.b32.xlu0 %v423, 127
      %v509 = vpop.permute.xlu0 %508
      %v510 = vsel %vm262, %v507, %v509
      %v511 = vsel %vm262, %v509, %v507
      %v512 = vsel %vm157, %v510, 0.0
      %v513 = vsel %vm158, %v511, 0.0
      %v514 = vld [vmem:[%s1 + $0xa0] sm:$0xff]
      %516 = vset.pattern.permute.xlu0 0
      %517 = vperm.xlu0 %516, %v514
      %v518 = vpop.permute.xlu0 %517
      %v520 = vmul.f32 %v518, %v512
      %v521 = vmul.f32 %v518, %v513
      %v522 = vadd.f32 %v504, %v520
      %v523 = vadd.f32 %v505, %v521
      %524 = vrot.lane.b32.xlu0 %v422, 113
      %v525 = vpop.permute.xlu0 %524
      %526 = vrot.lane.b32.xlu0 %v423, 113
      %v527 = vpop.permute.xlu0 %526
      %v528 = vsel %vm281, %v525, %v527
      %v529 = vsel %vm281, %v527, %v525
      %v530 = vsel %vm163, %v528, 0.0
      %v531 = vsel %vm164, %v529, 0.0
      %v532 = vld [vmem:[%s1 + $0xa8] sm:$0xff]
      %534 = vset.pattern.permute.xlu0 0
      %535 = vperm.xlu0 %534, %v532
      %v536 = vpop.permute.xlu0 %535
      %v538 = vmul.f32 %v536, %v530
      %v539 = vmul.f32 %v536, %v531
      %v540 = vadd.f32 %v522, %v538
      %v541 = vadd.f32 %v523, %v539
      %542 = vrot.lane.b32.xlu0 %v422, 112
      %v543 = vpop.permute.xlu0 %542
      %544 = vrot.lane.b32.xlu0 %v423, 112
      %v545 = vpop.permute.xlu0 %544
      %v546 = vsel %vm300, %v543, %v545
      %v547 = vsel %vm300, %v545, %v543
      %v548 = vsel %vm153, %v546, 0.0
      %v549 = vsel %vm154, %v547, 0.0
      %v550 = vld [vmem:[%s1 + $0xb0] sm:$0xff]
      %552 = vset.pattern.permute.xlu0 0
      %553 = vperm.xlu0 %552, %v550
      %v554 = vpop.permute.xlu0 %553
      %v556 = vmul.f32 %v554, %v548
      %v557 = vmul.f32 %v554, %v549
      %v558 = vadd.f32 %v540, %v556
      %v559 = vadd.f32 %v541, %v557
      %560 = vrot.lane.b32.xlu0 %v422, 111
      %v561 = vpop.permute.xlu0 %560
      %562 = vrot.lane.b32.xlu0 %v423, 111
      %v563 = vpop.permute.xlu0 %562
      %v564 = vsel %vm319, %v561, %v563
      %v565 = vsel %vm319, %v563, %v561
      %v566 = vsel %vm165, %v564, 0.0
      %v567 = vsel %vm166, %v565, 0.0
      %v568 = vld [vmem:[%s1 + $0xb8] sm:$0xff]
      %570 = vset.pattern.permute.xlu0 0
      %571 = vperm.xlu0 %570, %v568
      %v572 = vpop.permute.xlu0 %571
      %v574 = vmul.f32 %v572, %v566
      %v575 = vmul.f32 %v572, %v567
      %v576 = vadd.f32 %v558, %v574
      %v577 = vadd.f32 %v559, %v575
      %v578 = vld [vmem:[%s1 + $0xc0] sm:$0xff]
      %580 = vset.pattern.permute.xlu0 0
      %581 = vperm.xlu0 %580, %v578
      %v582 = vpop.permute.xlu0 %581
      %v584 = vadd.f32 %v576, %v582
      %v585 = vadd.f32 %v577, %v582
      %v586 = vld [vmem:[%s1 + $0xc8] sm:$0xff]
      %588 = vset.pattern.permute.xlu0 0
      %589 = vperm.xlu0 %588, %v586
      %v590 = vpop.permute.xlu0 %589
      %v592 = vlaneseq
      %v593 = vshrl.u32 %v592, 7
      %v594 = vsub.s32 0, %v593
      %v595 = vrot.slane %v584, %v594
      %v596 = vlaneseq
      %v597 = vshrl.u32 %v596, 7
      %v598 = vsub.s32 0, %v597
      %v599 = vrot.slane %v585, %v598
      %v600 = vmul.f32 %v590, %v595
      %v601 = vmul.f32 %v590, %v599
      %v602 = vadd.f32 %v600, 0.0
      %v603 = vadd.f32 %v601, 0.0
      %v604 = vld [vmem:[%s1 + $0xd0] sm:$0xff]
      %606 = vset.pattern.permute.xlu0 0
      %607 = vperm.xlu0 %606, %v604
      %v608 = vpop.permute.xlu0 %607
      %v610 = vlaneseq
      %v611 = vshrl.u32 %v610, 7
      %v612 = vsub.s32 1, %v611
      %v613 = vrot.slane %v584, %v612
      %v614 = vlaneseq
      %v615 = vshrl.u32 %v614, 7
      %v616 = vsub.s32 1, %v615
      %v617 = vrot.slane %v585, %v616
      %v618 = vmul.f32 %v608, %v613
      %v619 = vmul.f32 %v608, %v617
      %v620 = vadd.f32 %v602, %v618
      %v621 = vadd.f32 %v603, %v619
      %v622 = vld [vmem:[%s1 + $0xd8] sm:$0xff]
      %624 = vset.pattern.permute.xlu0 0
      %625 = vperm.xlu0 %624, %v622
      %v626 = vpop.permute.xlu0 %625
      %v628 = vlaneseq
      %v629 = vshrl.u32 %v628, 7
      %v630 = vsub.s32 2, %v629
      %v631 = vrot.slane %v584, %v630
      %v632 = vlaneseq
      %v633 = vshrl.u32 %v632, 7
      %v634 = vsub.s32 2, %v633
      %v635 = vrot.slane %v585, %v634
      %v636 = vmul.f32 %v626, %v631
      %v637 = vmul.f32 %v626, %v635
      %v638 = vadd.f32 %v620, %v636
      %v639 = vadd.f32 %v621, %v637
      %v640 = vld [vmem:[%s1 + $0xe0] sm:$0xff]
      %642 = vset.pattern.permute.xlu0 0
      %643 = vperm.xlu0 %642, %v640
      %v644 = vpop.permute.xlu0 %643
      %v646 = vlaneseq
      %v647 = vshrl.u32 %v646, 7
      %v648 = vsub.s32 3, %v647
      %v649 = vrot.slane %v584, %v648
      %v650 = vlaneseq
      %v651 = vshrl.u32 %v650, 7
      %v652 = vsub.s32 3, %v651
      %v653 = vrot.slane %v585, %v652
      %v654 = vmul.f32 %v644, %v649
      %v655 = vmul.f32 %v644, %v653
      %v656 = vadd.f32 %v638, %v654
      %v657 = vadd.f32 %v639, %v655
      %v658 = vld [vmem:[%s1 + $0xe8] sm:$0xff]
      %660 = vset.pattern.permute.xlu0 0
      %661 = vperm.xlu0 %660, %v658
      %v662 = vpop.permute.xlu0 %661
      %v664 = vlaneseq
      %v665 = vshrl.u32 %v664, 7
      %v666 = vsub.s32 4, %v665
      %v667 = vrot.slane %v584, %v666
      %v668 = vlaneseq
      %v669 = vshrl.u32 %v668, 7
      %v670 = vsub.s32 4, %v669
      %v671 = vrot.slane %v585, %v670
      %v672 = vmul.f32 %v662, %v667
      %v673 = vmul.f32 %v662, %v671
      %v674 = vadd.f32 %v656, %v672
      %v675 = vadd.f32 %v657, %v673
      %v676 = vld [vmem:[%s1 + $0xf0] sm:$0xff]
      %678 = vset.pattern.permute.xlu0 0
      %679 = vperm.xlu0 %678, %v676
      %v680 = vpop.permute.xlu0 %679
      %v682 = vlaneseq
      %v683 = vshrl.u32 %v682, 7
      %v684 = vsub.s32 5, %v683
      %v685 = vrot.slane %v584, %v684
      %v686 = vlaneseq
      %v687 = vshrl.u32 %v686, 7
      %v688 = vsub.s32 5, %v687
      %v689 = vrot.slane %v585, %v688
      %v690 = vmul.f32 %v680, %v685
      %v691 = vmul.f32 %v680, %v689
      %v692 = vadd.f32 %v674, %v690
      %v693 = vadd.f32 %v675, %v691
      %v694 = vld [vmem:[%s1 + $0xf8] sm:$0xff]
      %696 = vset.pattern.permute.xlu0 0
      %697 = vperm.xlu0 %696, %v694
      %v698 = vpop.permute.xlu0 %697
      %v700 = vlaneseq
      %v701 = vshrl.u32 %v700, 7
      %v702 = vsub.s32 6, %v701
      %v703 = vrot.slane %v584, %v702
      %v704 = vlaneseq
      %v705 = vshrl.u32 %v704, 7
      %v706 = vsub.s32 6, %v705
      %v707 = vrot.slane %v585, %v706
      %v708 = vmul.f32 %v698, %v703
      %v709 = vmul.f32 %v698, %v707
      %v710 = vadd.f32 %v692, %v708
      %v711 = vadd.f32 %v693, %v709
      %v712 = vld [vmem:[%s1 + $0x100] sm:$0xff]
      %714 = vset.pattern.permute.xlu0 0
      %715 = vperm.xlu0 %714, %v712
      %v716 = vpop.permute.xlu0 %715
      %v718 = vlaneseq
      %v719 = vshrl.u32 %v718, 7
      %v720 = vsub.s32 7, %v719
      %v721 = vrot.slane %v584, %v720
      %v722 = vlaneseq
      %v723 = vshrl.u32 %v722, 7
      %v724 = vsub.s32 7, %v723
      %v725 = vrot.slane %v585, %v724
      %v726 = vmul.f32 %v716, %v721
      %v727 = vmul.f32 %v716, %v725
      %v728 = vadd.f32 %v710, %v726
      %v729 = vadd.f32 %v711, %v727
      %v730 = vld [vmem:[%s1 + $0x108] sm:$0xff]
      %732 = vset.pattern.permute.xlu0 0
      %733 = vperm.xlu0 %732, %v730
      %v734 = vpop.permute.xlu0 %733
      %v737 = vlaneseq
      %v738 = vshrl.u32 %v737, 7
      %v739 = vsub.s32 0, %v738
      %v740 = vrot.slane %v167, %v739
      %v741 = vlaneseq
      %v742 = vshrl.u32 %v741, 7
      %v743 = vsub.s32 4, %v742
      %v744 = vrot.slane %v167, %v743
      %v747 = vlaneseq
      %v748 = vshrl.u32 %v747, 7
      %v749 = vsub.s32 0, %v748
      %v750 = vrot.slane %v740, %v749
      %v751 = vlaneseq
      %v752 = vshrl.u32 %v751, 7
      %v753 = vsub.s32 0, %v752
      %v754 = vrot.slane %v744, %v753
      %v755 = vmul.f32 %v734, %v750
      %v756 = vmul.f32 %v734, %v754
      %v757 = vadd.f32 %v755, 0.0
      %v758 = vadd.f32 %v756, 0.0
      %v759 = vld [vmem:[%s1 + $0x110] sm:$0xff]
      %761 = vset.pattern.permute.xlu0 0
      %762 = vperm.xlu0 %761, %v759
      %v763 = vpop.permute.xlu0 %762
      %v765 = vlaneseq
      %v766 = vshrl.u32 %v765, 7
      %v767 = vsub.s32 1, %v766
      %v768 = vrot.slane %v167, %v767
      %v769 = vlaneseq
      %v770 = vshrl.u32 %v769, 7
      %v771 = vsub.s32 5, %v770
      %v772 = vrot.slane %v167, %v771
      %v775 = vlaneseq
      %v776 = vshrl.u32 %v775, 7
      %v777 = vsub.s32 1, %v776
      %v778 = vrot.slane %v768, %v777
      %v779 = vlaneseq
      %v780 = vshrl.u32 %v779, 7
      %v781 = vsub.s32 1, %v780
      %v782 = vrot.slane %v772, %v781
      %v783 = vmul.f32 %v763, %v778
      %v784 = vmul.f32 %v763, %v782
      %v785 = vadd.f32 %v757, %v783
      %v786 = vadd.f32 %v758, %v784
      %v787 = vld [vmem:[%s1 + $0x118] sm:$0xff]
      %789 = vset.pattern.permute.xlu0 0
      %790 = vperm.xlu0 %789, %v787
      %v791 = vpop.permute.xlu0 %790
      %v793 = vlaneseq
      %v794 = vshrl.u32 %v793, 7
      %v795 = vsub.s32 2, %v794
      %v796 = vrot.slane %v167, %v795
      %v797 = vlaneseq
      %v798 = vshrl.u32 %v797, 7
      %v799 = vsub.s32 6, %v798
      %v800 = vrot.slane %v167, %v799
      %v803 = vlaneseq
      %v804 = vshrl.u32 %v803, 7
      %v805 = vsub.s32 2, %v804
      %v806 = vrot.slane %v796, %v805
      %v807 = vlaneseq
      %v808 = vshrl.u32 %v807, 7
      %v809 = vsub.s32 2, %v808
      %v810 = vrot.slane %v800, %v809
      %v811 = vmul.f32 %v791, %v806
      %v812 = vmul.f32 %v791, %v810
      %v813 = vadd.f32 %v785, %v811
      %v814 = vadd.f32 %v786, %v812
      %v815 = vld [vmem:[%s1 + $0x120] sm:$0xff]
      %817 = vset.pattern.permute.xlu0 0
      %818 = vperm.xlu0 %817, %v815
      %v819 = vpop.permute.xlu0 %818
      %v821 = vlaneseq
      %v822 = vshrl.u32 %v821, 7
      %v823 = vsub.s32 3, %v822
      %v824 = vrot.slane %v167, %v823
      %v825 = vlaneseq
      %v826 = vshrl.u32 %v825, 7
      %v827 = vsub.s32 7, %v826
      %v828 = vrot.slane %v167, %v827
      %v831 = vlaneseq
      %v832 = vshrl.u32 %v831, 7
      %v833 = vsub.s32 3, %v832
      %v834 = vrot.slane %v824, %v833
      %v835 = vlaneseq
      %v836 = vshrl.u32 %v835, 7
      %v837 = vsub.s32 3, %v836
      %v838 = vrot.slane %v828, %v837
      %v839 = vmul.f32 %v819, %v834
      %v840 = vmul.f32 %v819, %v838
      %v841 = vadd.f32 %v813, %v839
      %v842 = vadd.f32 %v814, %v840
      %v843 = vadd.f32 %v728, %v841
      %v844 = vadd.f32 %v729, %v842
      %v845 = vld [vmem:[%s1 + $0x128] sm:$0xff]
      %847 = vset.pattern.permute.xlu0 0
      %848 = vperm.xlu0 %847, %v845
      %v849 = vpop.permute.xlu0 %848
      %v851 = vadd.f32 %v843, %v849
      %v852 = vadd.f32 %v844, %v849
      %853 = vst [vmem:[%s143] sm:$0xff] %v851
      %854 = vst [vmem:[%s143 + $0x8] sm:$0xff] %v852
      %p855 = scmp.lt.s32.totalorder %s13, 1
      %s856 = scalar_select %p855, %s13, 1
      %s857 = smul.addr %s856, 2
      %s858 = smul.addr %s857, 8
      %s859 = scalar_lea.vmem %s2, %s858
      // Predicated region
      $region29: #{block_forward.1} parent=27 // pred_check
        %p860 = pneg %p78
      $region30: #{block_forward.1} parent=27 // pred_check_branch
        %862 = sbr.rel (%p860) target = $region32
      $region31: #{block_forward.1} parent=27 // pred_region
        _
      $region32: #{block_forward.1} parent=27 // pred_fallthru
        _
    $region28: #{block_forward.1} parent=5 // pred_fallthru
      _
    %p863 = scmp.le.s32.totalorder 2, %s8
    // Predicated region
    $region33: #{block_forward.1} parent=5 // pred_check
      %p864 = pneg %p863
    $region34: #{block_forward.1} parent=5 // pred_check_branch
      %866 = sbr.rel (%p864) target = $region36
    $region35: #{block_forward.1} parent=5 // pred_region
      %s867 = ssub.s32 %s8, 2
      // Predicated region
      $region37: #{block_forward.1} parent=35 // pred_check
        %p868 = pneg %p84
      $region38: #{block_forward.1} parent=35 // pred_check_branch
        %870 = sbr.rel (%p868) target = $region40
      $region39: #{block_forward.1} parent=35 // pred_region
        %p871 = scmp.lt.s32.totalorder %s14, 1
        %s872 = scalar_select %p871, %s14, 1
        %s873 = smul.addr %s872, 2
        %s874 = smul.addr %s873, 8
        %s875 = scalar_lea.vmem %s2, %s874
      $region40: #{block_forward.1} parent=35 // pred_fallthru
        _
    $region36: #{block_forward.1} parent=5 // pred_fallthru
      _
  $region6: #{block_forward.1} parent=0 // loop_footer
    %s12 = sadd.s32 1, %s8
  $region7: #{block_forward.1} parent=0 // loop_footer_branch
    %7 = sbr.rel target = $region3
  $region8: #{block_forward.1} parent=0 // loop_exit
    _

</llo_original>
